<compile_context>
chip_gen: v6e
topology: v6e:2x2x1
jax: 0.10.0
libtpu: 0.0.40
codegen_flags: <defaults>
</compile_context>

<pallas_src>
import functools

import jax
import jax.numpy as jnp
from jax.experimental import pallas as pl
from jax.experimental.pallas import tpu as pltpu


def _round_up(x, m):
    return ((x + m - 1) // m) * m


def _ffn_kernel(x_ref, w1_ref, b1_ref, w2_ref, b2_ref, o_ref, acc_ref):
    # x_ref:  (tm, n_in)        row tile
    # w1_ref: (n_in, tk)        hidden-tile slice of W1
    # b1_ref: (1, tk)
    # w2_ref: (tk, n_in)        hidden-tile slice of W2
    # b2_ref: (1, n_in)
    # o_ref:  (tm, n_in)
    # acc_ref: VMEM (tm, n_in) f32 accumulator (persists across hidden tiles)
    k = pl.program_id(1)

    @pl.when(k == 0)
    def _():
        # Fold the second bias into the accumulator init.
        acc_ref[...] = jnp.broadcast_to(
            b2_ref[...].astype(jnp.float32), acc_ref.shape)

    # First matmul + bias + ReLU on the (tm, tk) hidden slice only.
    x = x_ref[...].astype(w1_ref.dtype)
    h = jnp.dot(x, w1_ref[...], preferred_element_type=jnp.float32)
    h = jnp.maximum(h + b1_ref[...].astype(jnp.float32), 0.0)

    # Second matmul, accumulated in f32.
    acc_ref[...] += jnp.dot(h.astype(w2_ref.dtype), w2_ref[...],
                            preferred_element_type=jnp.float32)

    @pl.when(k == pl.num_programs(1) - 1)
    def _():
        # Dropout == identity (eval mode).
        o_ref[...] = acc_ref[...].astype(o_ref.dtype)


@functools.partial(jax.jit, static_argnames=("tm", "tk"))
def position_wise_feed_forward(x, w1, b1, w2, b2, *, tm=256, tk=512):
    """x: (..., n_in). w1: (n_in, n_hidden) (pre-transposed). w2: (n_hidden, n_in)."""
    orig_shape = x.shape
    n_in = x.shape[-1]
    n_hidden = w1.shape[1]
    M = 1
    for d in orig_shape[:-1]:
        M *= d

    x2d = x.reshape(M, n_in)

    # --- Row tiling: clamp tm for tiny inputs, pad rows to a multiple of tm.
    tm = min(tm, _round_up(M, 8))
    M_pad = _round_up(M, tm)
    if M_pad != M:
        x2d = jnp.pad(x2d, ((0, M_pad - M), (0, 0)))

    # --- Hidden-axis tiling: stream W1/W2 in tk-wide chunks and accumulate.
    if n_hidden <= tk:
        tk = n_hidden
        h_pad = n_hidden
    else:
        tk = _round_up(tk, 128)
        h_pad = _round_up(n_hidden, tk)
    if h_pad != n_hidden:
        # Zero-padded hidden units: relu(x@0 + 0) = 0, then 0 @ 0-rows == 0.
        w1 = jnp.pad(w1, ((0, 0), (0, h_pad - n_hidden)))
        b1 = jnp.pad(b1, ((0, h_pad - n_hidden),))
        w2 = jnp.pad(w2, ((0, h_pad - n_hidden), (0, 0)))

    b1_2d = b1.reshape(1, h_pad)
    b2_2d = b2.reshape(1, n_in)

    grid = (M_pad // tm, h_pad // tk)

    # Explicit VMEM budget: double-buffered tiles + f32 accumulator + slack.
    isz = max(x2d.dtype.itemsize, w1.dtype.itemsize)
    tile_elems = (tm * n_in            # x tile
                  + n_in * tk + tk     # w1 tile + b1 tile
                  + tk * n_in + n_in   # w2 tile + b2
                  + tm * n_in)         # out tile
    vmem_limit = int(min(100 * 1024 * 1024,
                         max(32 * 1024 * 1024,
                             2 * isz * tile_elems + 4 * tm * n_in + (2 << 20))))

    out = pl.pallas_call(
        _ffn_kernel,
        out_shape=jax.ShapeDtypeStruct((M_pad, n_in), x.dtype),
        grid_spec=pltpu.PrefetchScalarGridSpec(
            num_scalar_prefetch=0,
            grid=grid,
            in_specs=[
                pl.BlockSpec((tm, n_in), lambda i, k: (i, 0)),     # x rows
                pl.BlockSpec((n_in, tk), lambda i, k: (0, k)),     # W1 hidden slice
                pl.BlockSpec((1, tk), lambda i, k: (0, k)),        # b1 hidden slice
                pl.BlockSpec((tk, n_in), lambda i, k: (k, 0)),     # W2 hidden slice
                pl.BlockSpec((1, n_in), lambda i, k: (0, 0)),      # b2
            ],
            out_specs=pl.BlockSpec((tm, n_in), lambda i, k: (i, 0)),
            scratch_shapes=[pltpu.VMEM((tm, n_in), jnp.float32)],
        ),
        compiler_params=pltpu.CompilerParams(
            dimension_semantics=("parallel", "arbitrary"),
            vmem_limit_bytes=vmem_limit),
    )(x2d, w1, b1_2d, w2, b2_2d)

    if M_pad != M:
        out = out[:M]
    return out.reshape(orig_shape)


if __name__ == "__main__":
    # Small deterministic example: batch=2, seq=8, n_in=32, n_hidden=64.
    B, S, n_in, n_hidden = 2, 8, 32, 64
    key = jax.random.PRNGKey(0)
    kx, kw1, kb1, kw2, kb2 = jax.random.split(key, 5)

    x = jax.random.normal(kx, (B, S, n_in), dtype=jnp.float32)

    # Deterministic init mimicking nn.Linear uniform(-1/sqrt(in), 1/sqrt(in)).
    lim1 = 1.0 / (n_in ** 0.5)
    lim2 = 1.0 / (n_hidden ** 0.5)
    # Stored pre-transposed: (in, out).
    w1 = jax.random.uniform(kw1, (n_in, n_hidden), jnp.float32, -lim1, lim1)
    b1 = jax.random.uniform(kb1, (n_hidden,), jnp.float32, -lim1, lim1)
    w2 = jax.random.uniform(kw2, (n_hidden, n_in), jnp.float32, -lim2, lim2)
    b2 = jax.random.uniform(kb2, (n_in,), jnp.float32, -lim2, lim2)

    # Pure-JAX reference (eval-mode dropout == identity).
    ref = jnp.maximum(x @ w1 + b1, 0.0) @ w2 + b2

    # f32 weights: should match the reference tightly.
    out = position_wise_feed_forward(x, w1, b1, w2, b2)
    out = jax.block_until_ready(out)
    assert out.shape == (B, S, n_in)
    assert jnp.allclose(out, ref, atol=1e-5, rtol=1e-5)

    # bf16 weights (MXU fast path on v5e/v6e/v7x): looser tolerance.
    out_bf16 = position_wise_feed_forward(
        x,
        w1.astype(jnp.bfloat16), b1.astype(jnp.bfloat16),
        w2.astype(jnp.bfloat16), b2.astype(jnp.bfloat16))
    out_bf16 = jax.block_until_ready(out_bf16)
    assert jnp.allclose(out_bf16.astype(jnp.float32), ref, atol=1e-1, rtol=1e-1)

    print("KERNEL_OK")
</pallas_src>

<mosaic_0001>
module attributes {stable_mosaic.version = 11 : i64} {
  func.func @_ffn_kernel(%arg0: i32, %arg1: i32, %arg2: memref<16x32xf32, #tpu.memory_space<vmem>>, %arg3: memref<32x64xf32, #tpu.memory_space<vmem>>, %arg4: memref<1x64xf32, #tpu.memory_space<vmem>>, %arg5: memref<64x32xf32, #tpu.memory_space<vmem>>, %arg6: memref<1x32xf32, #tpu.memory_space<vmem>>, %arg7: memref<16x32xf32, #tpu.memory_space<vmem>>, %arg8: memref<16x32xf32, #tpu.memory_space<vmem>>) attributes {dimension_semantics = [#tpu.dimension_semantics<parallel>, #tpu.dimension_semantics<arbitrary>], iteration_bounds = array<i64: 1, 1>, scalar_prefetch = 0 : i64, scratch_operands = 1 : i64, tpu.core_type = #tpu.core_type<tc>, window_params = [{transform_indices = @transform_0, window_bounds = array<i64: 16, 32>}, {transform_indices = @transform_1, window_bounds = array<i64: 32, 64>}, {transform_indices = @transform_2, window_bounds = array<i64: 1, 64>}, {transform_indices = @transform_3, window_bounds = array<i64: 64, 32>}, {pipeline_mode = #tpu.pipeline_mode<synchronous>, transform_indices = @transform_4, window_bounds = array<i64: 1, 32>}, {transform_indices = @transform_5, window_bounds = array<i64: 16, 32>}]} {
    %c0_i32 = arith.constant 0 : i32
    %0 = arith.cmpi eq, %arg1, %c0_i32 : i32
    %1 = arith.extui %0 : i1 to i32
    %c0_i32_0 = arith.constant 0 : i32
    %2 = arith.cmpi ne, %1, %c0_i32_0 : i32
    scf.if %2 {
      %c0_16 = arith.constant 0 : index
      %c0_17 = arith.constant 0 : index
      %19 = vector.load %arg6[%c0_16, %c0_17] : memref<1x32xf32, #tpu.memory_space<vmem>>, vector<1x32xf32>
      %20 = vector.shape_cast %19 : vector<1x32xf32> to vector<1x32xf32>
      %21 = vector.broadcast %20 : vector<1x32xf32> to vector<16x32xf32>
      %c0_18 = arith.constant 0 : index
      %c0_19 = arith.constant 0 : index
      %22 = vector.load %arg8[%c0_18, %c0_19] : memref<16x32xf32, #tpu.memory_space<vmem>>, vector<16x32xf32>
      tpu.vector_store %arg8[%c0_18, %c0_19], %21 {strides = array<i32>} : memref<16x32xf32, #tpu.memory_space<vmem>>, vector<16x32xf32>,
    } else {
    }
    %c0 = arith.constant 0 : index
    %c0_1 = arith.constant 0 : index
    %3 = vector.load %arg2[%c0, %c0_1] : memref<16x32xf32, #tpu.memory_space<vmem>>, vector<16x32xf32>
    %c0_2 = arith.constant 0 : index
    %c0_3 = arith.constant 0 : index
    %4 = vector.load %arg3[%c0_2, %c0_3] : memref<32x64xf32, #tpu.memory_space<vmem>>, vector<32x64xf32>
    %cst = arith.constant dense<0.000000e+00> : vector<16x64xf32>
    %5 = tpu.matmul %3, %4, %cst {dimension_numbers = #tpu.dot_dimension_numbers<[1], [0], [0], [1], [0, 0, 1, 1], [], []>} : vector<16x32xf32>, vector<32x64xf32>, vector<16x64xf32> -> vector<16x64xf32>
    %c0_4 = arith.constant 0 : index
    %c0_5 = arith.constant 0 : index
    %6 = vector.load %arg4[%c0_4, %c0_5] : memref<1x64xf32, #tpu.memory_space<vmem>>, vector<1x64xf32>
    %7 = vector.broadcast %6 : vector<1x64xf32> to vector<16x64xf32>
    %8 = arith.addf %5, %7 : vector<16x64xf32>
    %cst_6 = arith.constant 0.000000e+00 : f32
    %9 = vector.broadcast %cst_6 : f32 to vector<16x64xf32>
    %10 = arith.maximumf %8, %9 : vector<16x64xf32>
    %c0_7 = arith.constant 0 : index
    %c0_8 = arith.constant 0 : index
    %11 = vector.load %arg8[%c0_7, %c0_8] : memref<16x32xf32, #tpu.memory_space<vmem>>, vector<16x32xf32>
    %c0_9 = arith.constant 0 : index
    %c0_10 = arith.constant 0 : index
    %12 = vector.load %arg5[%c0_9, %c0_10] : memref<64x32xf32, #tpu.memory_space<vmem>>, vector<64x32xf32>
    %cst_11 = arith.constant dense<0.000000e+00> : vector<16x32xf32>
    %13 = tpu.matmul %10, %12, %cst_11 {dimension_numbers = #tpu.dot_dimension_numbers<[1], [0], [0], [1], [0, 0, 1, 1], [], []>} : vector<16x64xf32>, vector<64x32xf32>, vector<16x32xf32> -> vector<16x32xf32>
    %14 = arith.addf %11, %13 : vector<16x32xf32>
    %c0_12 = arith.constant 0 : index
    %c0_13 = arith.constant 0 : index
    %15 = vector.load %arg8[%c0_12, %c0_13] : memref<16x32xf32, #tpu.memory_space<vmem>>, vector<16x32xf32>
    tpu.vector_store %arg8[%c0_12, %c0_13], %14 {strides = array<i32>} : memref<16x32xf32, #tpu.memory_space<vmem>>, vector<16x32xf32>,
    %c0_i32_14 = arith.constant 0 : i32
    %16 = arith.cmpi eq, %arg1, %c0_i32_14 : i32
    %17 = arith.extui %16 : i1 to i32
    %c0_i32_15 = arith.constant 0 : i32
    %18 = arith.cmpi ne, %17, %c0_i32_15 : i32
    scf.if %18 {
      %c0_16 = arith.constant 0 : index
      %c0_17 = arith.constant 0 : index
      %19 = vector.load %arg8[%c0_16, %c0_17] : memref<16x32xf32, #tpu.memory_space<vmem>>, vector<16x32xf32>
      %c0_18 = arith.constant 0 : index
      %c0_19 = arith.constant 0 : index
      %20 = vector.load %arg7[%c0_18, %c0_19] : memref<16x32xf32, #tpu.memory_space<vmem>>, vector<16x32xf32>
      tpu.vector_store %arg7[%c0_18, %c0_19], %19 {strides = array<i32>} : memref<16x32xf32, #tpu.memory_space<vmem>>, vector<16x32xf32>,
    } else {
    }
    return
  }
  func.func @transform_0(%arg0: i32, %arg1: i32) -> (i32, i32) {
    %c0_i32 = arith.constant 0 : i32
    %c0_i32_0 = arith.constant 0 : i32
    return %arg0, %c0_i32 : i32, i32
  }
  func.func @transform_1(%arg0: i32, %arg1: i32) -> (i32, i32) {
    %c0_i32 = arith.constant 0 : i32
    %c0_i32_0 = arith.constant 0 : i32
    return %c0_i32, %arg1 : i32, i32
  }
  func.func @transform_2(%arg0: i32, %arg1: i32) -> (i32, i32) {
    %c0_i32 = arith.constant 0 : i32
    %c0_i32_0 = arith.constant 0 : i32
    return %c0_i32, %arg1 : i32, i32
  }
  func.func @transform_3(%arg0: i32, %arg1: i32) -> (i32, i32) {
    %c0_i32 = arith.constant 0 : i32
    %c0_i32_0 = arith.constant 0 : i32
    return %arg1, %c0_i32 : i32, i32
  }
  func.func @transform_4(%arg0: i32, %arg1: i32) -> (i32, i32) {
    %c0_i32 = arith.constant 0 : i32
    %c0_i32_0 = arith.constant 0 : i32
    %c0_i32_1 = arith.constant 0 : i32
    return %c0_i32, %c0_i32_0 : i32, i32
  }
  func.func @transform_5(%arg0: i32, %arg1: i32) -> (i32, i32) {
    %c0_i32 = arith.constant 0 : i32
    %c0_i32_0 = arith.constant 0 : i32
    return %arg0, %c0_i32 : i32, i32
  }
}

</mosaic_0001>

<llo_original>
// kernel: position_wise_feed_forward.1
$region0: #{position_wise_feed_forward.1}
  #allocation0 [shape = 'u32[]', space=smem, size = 0x4, offset = 0x4, fixed_abs, tag = 'smem constant byte address 0x4 - core index']
  #allocation1 [shape = 'u32[144,128]{1,0:T(1,128)}', space=vmem, size = 0x12000, scoped, tag = 'internal scratch']
  #allocation2 [shape = 'f32[16,32]{1,0:T(8,128)}', space=vmem, size = 0x2000, scoped, tag = 'scratch operand']
  %s0 = inlined_call_operand.vmem [shape: f32[16,32], index: 0, kind: input, shape index: {}]
  %s1 = inlined_call_operand.vmem [shape: f32[32,64], index: 1, kind: input, shape index: {}]
  %s2 = inlined_call_operand.vmem [shape: f32[1,64], index: 2, kind: input, shape index: {}]
  %s3 = inlined_call_operand.vmem [shape: f32[64,32], index: 3, kind: input, shape index: {}]
  %s4 = inlined_call_operand.vmem [shape: f32[1,32], index: 4, kind: input, shape index: {}]
  %s5 = inlined_call_operand.hbm [shape: f32[16,32], index: 5, kind: output, shape index: {}]
  %s6 = sld [smem:[#allocation0]]
  $region38: #{position_wise_feed_forward.1} parent=0
    _
  %s8 = ssub.s32 1, %s6
  %s9 = scalar_select 0, %s8, %s6
  $region1: #{position_wise_feed_forward.1} parent=0
    #allocation3 [shape = 'u8[8192]{0}', space=vmem, size = 0x2000, scoped, tag = 'output window, operand 0, single buffered']
    #allocation4 [shape = 's32[1]{0}', space=sflag, size = 0x4, scoped, tag = 'scoped memory for position_wise_feed_forward.1']
    %10 = vsyncpa [#allocation4], 0
    // Predicated region
    $region2: #{position_wise_feed_forward.1} parent=1 // pred_check
      _
    $region3: #{position_wise_feed_forward.1} parent=1 // pred_check_branch
      %12 = sbr.rel (0) target = $region5
    $region4: #{position_wise_feed_forward.1} parent=1 // pred_region
      _
    $region5: #{position_wise_feed_forward.1} parent=1 // pred_fallthru
      _
    // Predicated region
    $region6: #{position_wise_feed_forward.1} parent=1 // pred_check
      _
    $region7: #{position_wise_feed_forward.1} parent=1 // pred_check_branch
      %14 = sbr.rel (0) target = $region9
    $region8: #{position_wise_feed_forward.1} parent=1 // pred_region
      _
    $region9: #{position_wise_feed_forward.1} parent=1 // pred_fallthru
      _
    // Predicated region
    $region10: #{position_wise_feed_forward.1} parent=1 // pred_check
      _
    $region11: #{position_wise_feed_forward.1} parent=1 // pred_check_branch
      %16 = sbr.rel (0) target = $region13
    $region12: #{position_wise_feed_forward.1} parent=1 // pred_region
      _
    $region13: #{position_wise_feed_forward.1} parent=1 // pred_fallthru
      _
    // Predicated region
    $region14: #{position_wise_feed_forward.1} parent=1 // pred_check
      _
    $region15: #{position_wise_feed_forward.1} parent=1 // pred_check_branch
      %18 = sbr.rel (0) target = $region17
    $region16: #{position_wise_feed_forward.1} parent=1 // pred_region
      _
    $region17: #{position_wise_feed_forward.1} parent=1 // pred_fallthru
      _
    // Predicated region
    $region18: #{position_wise_feed_forward.1} parent=1 // pred_check
      _
    $region19: #{position_wise_feed_forward.1} parent=1 // pred_check_branch
      %20 = sbr.rel (0) target = $region21
    $region20: #{position_wise_feed_forward.1} parent=1 // pred_region
      _
    $region21: #{position_wise_feed_forward.1} parent=1 // pred_fallthru
      _
    %p21 = scmp.eq.s32.totalorder 0, 0
    // Predicated region
    $region22: #{position_wise_feed_forward.1} parent=1 // pred_check
      %p22 = pneg %p21
    $region23: #{position_wise_feed_forward.1} parent=1 // pred_check_branch
      %24 = sbr.rel (%p22) target = $region25
    $region24: #{position_wise_feed_forward.1} parent=1 // pred_region
      %v25 = vld [vmem:[%s4] sm:$0x1]
      %v27 = vlaneseq
      %v28 = vshrl.u32 %v27, 7
      %v29 = vsub.s32 0, %v28
      %v30 = vrot.slane %v25, %v29
      %vm32 = vcmask 261120
      %33 = vst.msk [vmem:[#allocation2] sm:$0xff] %vm32, %v30
      %34 = vst.msk [vmem:[#allocation2 + $0x8] sm:$0xff] %vm32, %v30
    $region25: #{position_wise_feed_forward.1} parent=1 // pred_fallthru
      _
    %v35 = vld [vmem:[%s0] sm:$0xff]
    %v36 = vld [vmem:[%s0 + $0x8] sm:$0xff]
    %v37 = vld [vmem:[%s1] sm:$0xff]
    %v38 = vld [vmem:[%s1 + $0x8] sm:$0xff]
    %v39 = vld [vmem:[%s1 + $0x10] sm:$0xff]
    %v40 = vld [vmem:[%s1 + $0x18] sm:$0xff]
    %v41 = vld [vmem:[%s2] sm:$0x1]
    %v43 = vlaneseq
    %v44 = vshrl.u32 %v43, 7
    %v45 = vsub.s32 0, %v44
    %v46 = vrot.slane %v41, %v45
    %vm48 = vcmask 261120
    %v50 = vsel %vm48, %v35, 0
    %v53 = vsel %vm48, %v36, 0
    %55 = vmatprep.subr.mxu0 0.0
    %56 = vmatpush1.msra.mxu0 0.0
    %57 = vmatprep.subr.mxu0 0.0
    %58 = vmatpush1.msra.mxu0 0.0
    %59 = vmatprep.subr.mxu0 0.0
    %60 = vmatpush1.msra.mxu0 0.0
    %61 = vmatprep.subr.mxu0 0.0
    %62 = vmatpush1.msra.mxu0 0.0
    %63 = vmatprep.subr.mxu0 0.0
    %64 = vmatpush1.msra.mxu0 0.0
    %65 = vmatprep.subr.mxu0 0.0
    %66 = vmatpush1.msra.mxu0 0.0
    %67 = vmatprep.subr.mxu0 0.0
    %68 = vmatpush1.msra.mxu0 0.0
    %69 = vmatprep.subr.mxu0 0.0
    %70 = vmatpush1.msra.mxu0 0.0
    %71 = vmatprep.subr.mxu0 0.0
    %72 = vmatpush1.msra.mxu0 0.0
    %73 = vmatprep.subr.mxu0 0.0
    %74 = vmatpush1.msra.mxu0 0.0
    %75 = vmatprep.subr.mxu0 0.0
    %76 = vmatpush1.msra.mxu0 0.0
    %77 = vmatprep.subr.mxu0 0.0
    %78 = vmatpush1.msra.mxu0 0.0
    %79 = vmatprep.subr.mxu0 0.0
    %80 = vmatpush1.msra.mxu0 %v40
    %81 = vmatprep.subr.mxu0 0.0
    %82 = vmatpush1.msra.mxu0 %v39
    %83 = vmatprep.subr.mxu0 0.0
    %84 = vmatpush1.msra.mxu0 %v38
    %85 = vmatprep.subr.mxu0 0.0
    %86 = vmatpush1.msra.mxu0 %v37
    %87 = vmatprep.subr.mxu0 0.0
    %88 = vmatpush2.msra.mxu0 0.0
    %89 = vmatprep.subr.mxu0 0.0
    %90 = vmatpush2.msra.mxu0 0.0
    %91 = vmatprep.subr.mxu0 0.0
    %92 = vmatpush2.msra.mxu0 0.0
    %93 = vmatprep.subr.mxu0 0.0
    %94 = vmatpush2.msra.mxu0 0.0
    %95 = vmatprep.subr.mxu0 0.0
    %96 = vmatpush2.msra.mxu0 0.0
    %97 = vmatprep.subr.mxu0 0.0
    %98 = vmatpush2.msra.mxu0 0.0
    %99 = vmatprep.subr.mxu0 0.0
    %100 = vmatpush2.msra.mxu0 0.0
    %101 = vmatprep.subr.mxu0 0.0
    %102 = vmatpush2.msra.mxu0 0.0
    %103 = vmatprep.subr.mxu0 0.0
    %104 = vmatpush2.msra.mxu0 0.0
    %105 = vmatprep.subr.mxu0 0.0
    %106 = vmatpush2.msra.mxu0 0.0
    %107 = vmatprep.subr.mxu0 0.0
    %108 = vmatpush2.msra.mxu0 0.0
    %109 = vmatprep.subr.mxu0 0.0
    %110 = vmatpush2.msra.mxu0 0.0
    %111 = vmatprep.subr.mxu0 0.0
    %112 = vmatpush2.msra.mxu0 0.0
    %113 = vmatprep.subr.mxu0 0.0
    %114 = vmatpush2.msra.mxu0 0.0
    %115 = vmatprep.subr.mxu0 0.0
    %116 = vmatpush2.msra.mxu0 0.0
    %117 = vmatprep.subr.mxu0 0.0
    %118 = vmatpush2.msra.mxu0 0.0
    %119 = vmatprep.mubr.f32.mxu0 0.0
    %120 = vmatmul.mubr.f32.gmra.mxu0 %v50
    %v121 = vpop.f32.mrf.mxu0
    %v122 = vadd.f32 %v46, %v121
    %v123 = vpop.f32.mrf.mxu0
    %124 = vmatprep.mubr.f32.mxu0 0.0
    %125 = vmatmul.mubr.f32.gmra.mxu0 %v53
    %v126 = vpop.f32.mrf.mxu0
    %v127 = vadd.f32 %v46, %v126
    %v128 = vpop.f32.mrf.mxu0
    %129 = vdwg.mxu0
    %v130 = vmax.f32 %v122, 0.0
    %v131 = vmax.f32 %v127, 0.0
    %v132 = vld [vmem:[#allocation2] sm:$0xff]
    %v133 = vld [vmem:[#allocation2 + $0x8] sm:$0xff]
    %v134 = vld [vmem:[%s3] sm:$0xff]
    %v135 = vld [vmem:[%s3 + $0x8] sm:$0xff]
    %v136 = vld [vmem:[%s3 + $0x10] sm:$0xff]
    %v137 = vld [vmem:[%s3 + $0x18] sm:$0xff]
    %v138 = vld [vmem:[%s3 + $0x20] sm:$0xff]
    %v139 = vld [vmem:[%s3 + $0x28] sm:$0xff]
    %v140 = vld [vmem:[%s3 + $0x30] sm:$0xff]
    %v141 = vld [vmem:[%s3 + $0x38] sm:$0xff]
    %vm142 = vcmask 523264
    %v144 = vsel %vm142, %v130, 0
    %v147 = vsel %vm142, %v131, 0
    %149 = vmatprep.subr.mxu0 0.0
    %150 = vmatpush1.msra.mxu0 0.0
    %151 = vmatprep.subr.mxu0 0.0
    %152 = vmatpush1.msra.mxu0 0.0
    %153 = vmatprep.subr.mxu0 0.0
    %154 = vmatpush1.msra.mxu0 0.0
    %155 = vmatprep.subr.mxu0 0.0
    %156 = vmatpush1.msra.mxu0 0.0
    %157 = vmatprep.subr.mxu0 0.0
    %158 = vmatpush1.msra.mxu0 0.0
    %159 = vmatprep.subr.mxu0 0.0
    %160 = vmatpush1.msra.mxu0 0.0
    %161 = vmatprep.subr.mxu0 0.0
    %162 = vmatpush1.msra.mxu0 0.0
    %163 = vmatprep.subr.mxu0 0.0
    %164 = vmatpush1.msra.mxu0 0.0
    %165 = vmatprep.subr.mxu0 0.0
    %166 = vmatpush1.msra.mxu0 %v141
    %167 = vmatprep.subr.mxu0 0.0
    %168 = vmatpush1.msra.mxu0 %v140
    %169 = vmatprep.subr.mxu0 0.0
    %170 = vmatpush1.msra.mxu0 %v139
    %171 = vmatprep.subr.mxu0 0.0
    %172 = vmatpush1.msra.mxu0 %v138
    %173 = vmatprep.subr.mxu0 0.0
    %174 = vmatpush1.msra.mxu0 %v137
    %175 = vmatprep.subr.mxu0 0.0
    %176 = vmatpush1.msra.mxu0 %v136
    %177 = vmatprep.subr.mxu0 0.0
    %178 = vmatpush1.msra.mxu0 %v135
    %179 = vmatprep.subr.mxu0 0.0
    %180 = vmatpush1.msra.mxu0 %v134
    %181 = vmatprep.subr.mxu0 0.0
    %182 = vmatpush2.msra.mxu0 0.0
    %183 = vmatprep.subr.mxu0 0.0
    %184 = vmatpush2.msra.mxu0 0.0
    %185 = vmatprep.subr.mxu0 0.0
    %186 = vmatpush2.msra.mxu0 0.0
    %187 = vmatprep.subr.mxu0 0.0
    %188 = vmatpush2.msra.mxu0 0.0
    %189 = vmatprep.subr.mxu0 0.0
    %190 = vmatpush2.msra.mxu0 0.0
    %191 = vmatprep.subr.mxu0 0.0
    %192 = vmatpush2.msra.mxu0 0.0
    %193 = vmatprep.subr.mxu0 0.0
    %194 = vmatpush2.msra.mxu0 0.0
    %195 = vmatprep.subr.mxu0 0.0
    %196 = vmatpush2.msra.mxu0 0.0
    %197 = vmatprep.subr.mxu0 0.0
    %198 = vmatpush2.msra.mxu0 0.0
    %199 = vmatprep.subr.mxu0 0.0
    %200 = vmatpush2.msra.mxu0 0.0
    %201 = vmatprep.subr.mxu0 0.0
    %202 = vmatpush2.msra.mxu0 0.0
    %203 = vmatprep.subr.mxu0 0.0
    %204 = vmatpush2.msra.mxu0 0.0
    %205 = vmatprep.subr.mxu0 0.0
    %206 = vmatpush2.msra.mxu0 0.0
    %207 = vmatprep.subr.mxu0 0.0
    %208 = vmatpush2.msra.mxu0 0.0
    %209 = vmatprep.subr.mxu0 0.0
    %210 = vmatpush2.msra.mxu0 0.0
    %211 = vmatprep.subr.mxu0 0.0
    %212 = vmatpush2.msra.mxu0 0.0
    %213 = vmatprep.mubr.f32.mxu0 0.0
    %214 = vmatmul.mubr.f32.gmra.mxu0 %v144
    %v215 = vpop.f32.mrf.mxu0
    %v216 = vadd.f32 0.0, %v215
    %v217 = vpop.f32.mrf.mxu0
    %218 = vmatprep.mubr.f32.mxu0 0.0
    %219 = vmatmul.mubr.f32.gmra.mxu0 %v147
    %v220 = vpop.f32.mrf.mxu0
    %v221 = vadd.f32 0.0, %v220
    %v222 = vpop.f32.mrf.mxu0
    %223 = vdwg.mxu0
    %v224 = vadd.f32 %v132, %v216
    %v225 = vadd.f32 %v133, %v221
    %226 = vst.msk [vmem:[#allocation2] sm:$0xff] %vm48, %v224
    %227 = vst.msk [vmem:[#allocation2 + $0x8] sm:$0xff] %vm48, %v225
    // Predicated region
    $region26: #{position_wise_feed_forward.1} parent=1 // pred_check
      %p228 = pneg %p21
    $region27: #{position_wise_feed_forward.1} parent=1 // pred_check_branch
      %230 = sbr.rel (%p228) target = $region29
    $region28: #{position_wise_feed_forward.1} parent=1 // pred_region
      %v231 = vld [vmem:[#allocation2] sm:$0xff]
      %v232 = vld [vmem:[#allocation2 + $0x8] sm:$0xff]
      %233 = vst.msk [vmem:[#allocation3] sm:$0xff] %vm48, %v231
      %234 = vst.msk [vmem:[#allocation3 + $0x8] sm:$0xff] %vm48, %v232
    $region29: #{position_wise_feed_forward.1} parent=1 // pred_fallthru
      _
    // Predicated region
    $region30: #{position_wise_feed_forward.1} parent=1 // pred_check
      _
    $region31: #{position_wise_feed_forward.1} parent=1 // pred_check_branch
      %236 = sbr.rel (0) target = $region33
    $region32: #{position_wise_feed_forward.1} parent=1 // pred_region
      %s238 = ssub.s32 256, 256
      %239 = vsyncadd [#allocation4], %s238
      %s240 = sshll.u32 [#allocation3], 4
      %s241 = int_to_ptr.vmem [resolvable:$true] %s240
      %246 = dma.vmem_to_hbm [thread:$0]  %s241, 256, %s5, [#allocation4], 128, 128, 8
    $region33: #{position_wise_feed_forward.1} parent=1 // pred_fallthru
      _
    // Predicated region
    $region34: #{position_wise_feed_forward.1} parent=1 // pred_check
      _
    $region35: #{position_wise_feed_forward.1} parent=1 // pred_check_branch
      %248 = sbr.rel (0) target = $region37
    $region36: #{position_wise_feed_forward.1} parent=1 // pred_region
      %249 = dma.done [#allocation4], 256
    $region37: #{position_wise_feed_forward.1} parent=1 // pred_fallthru
      _
    %250 = vsyncpa [#allocation4], 1

</llo_original>
